<compile_context>
chip_gen: v6e
topology: v6e:2x2x1
jax: 0.10.0
libtpu: 0.0.40
codegen_flags: <defaults>
</compile_context>

<pallas_src>
import jax
import jax.numpy as jnp
from jax import lax
from jax.experimental import pallas as pl
from jax.experimental.pallas import tpu as pltpu


# ----------------------------------------------------------------------------
# Kernel: fused twin-critic MLP on one batch tile.
# ----------------------------------------------------------------------------
def _sac_value_kernel(s_ref, a_ref, w1s_ref, w1a_ref, b12_ref,
                      w2_ref, w3t_ref, b3_ref, out_ref):
    b12 = b12_ref[...]                                     # (2, 2H) f32
    # Layer 1: implicit concat([s, a]) -> split matmul into one f32 accumulator.
    h = (jnp.dot(s_ref[...], w1s_ref[...], preferred_element_type=jnp.float32)
         + jnp.dot(a_ref[...], w1a_ref[...], preferred_element_type=jnp.float32)
         + b12[0:1, :])
    h = jnp.maximum(h, 0.0).astype(w2_ref.dtype)
    # Layer 2: block-diagonal (2H, 2H) keeps the two heads independent.
    h = jnp.dot(h, w2_ref[...], preferred_element_type=jnp.float32) + b12[1:2, :]
    h = jnp.maximum(h, 0.0).astype(w3t_ref.dtype)
    # Layer 3, emitted transposed: (2, 2H) x (TB, 2H) contracting the feature
    # axis of both operands (same contraction class as q @ k^T in attention)
    # -> lane-dense (2, TB) output tile.
    out = lax.dot_general(w3t_ref[...], h, (((1,), (1,)), ((), ())),
                          preferred_element_type=jnp.float32)
    out_ref[...] = out + b3_ref[...]                       # (2, 1) broadcasts over lanes


# ----------------------------------------------------------------------------
# Parameter helpers.
# ----------------------------------------------------------------------------
def make_value_params(key, in_dim, hidden, out_dim=1):
    """PyTorch-Linear-like init, weights stored (in_features, out_features)."""
    keys = jax.random.split(key, 6)

    def lin(kw, kb, fan_in, fan_out):
        bound = 1.0 / jnp.sqrt(jnp.float32(fan_in))
        w = jax.random.uniform(kw, (fan_in, fan_out), jnp.float32, -bound, bound)
        b = jax.random.uniform(kb, (1, fan_out), jnp.float32, -bound, bound)
        return w, b

    w1, b1 = lin(keys[0], keys[1], in_dim, hidden)
    w2, b2 = lin(keys[2], keys[3], hidden, hidden)
    w3, b3 = lin(keys[4], keys[5], hidden, out_dim)
    return (w1, b1, w2, b2, w3, b3)


def pack_value_params(params1, params2, state_size, compute_dtype=jnp.bfloat16):
    """Fuse the two critics into one set of block-diagonal weights (done once,
    outside the hot path).  Weights are stored in `compute_dtype` (bf16 by
    default) for the MXU; biases stay f32 and are added on the f32 accumulator."""
    w1a_, b1a, w2a, b2a, w3a, b3a = params1
    w1b_, b1b, w2b, b2b, w3b, b3b = params2
    hidden = w1a_.shape[1]

    w1 = jnp.concatenate([w1a_, w1b_], axis=1)                  # (D, 2H)
    w1_s = w1[:state_size].astype(compute_dtype)                # (S, 2H)
    w1_a = w1[state_size:].astype(compute_dtype)                # (A, 2H)

    b12 = jnp.concatenate(                                      # (2, 2H) f32
        [jnp.concatenate([b1a, b1b], axis=1),
         jnp.concatenate([b2a, b2b], axis=1)], axis=0).astype(jnp.float32)

    z = jnp.zeros((hidden, hidden), jnp.float32)
    w2 = jnp.concatenate(                                       # (2H, 2H) block-diag
        [jnp.concatenate([w2a, z], axis=1),
         jnp.concatenate([z, w2b], axis=1)], axis=0).astype(compute_dtype)

    w3t = jnp.concatenate(                                      # (2, 2H) pre-transposed
        [jnp.concatenate([w3a.T, jnp.zeros_like(w3b).T], axis=1),
         jnp.concatenate([jnp.zeros_like(w3a).T, w3b.T], axis=1)],
        axis=0).astype(compute_dtype)
    b3t = jnp.concatenate([b3a, b3b], axis=1).T.astype(jnp.float32)   # (2, 1) f32

    return (w1_s, w1_a, b12, w2, w3t, b3t)


def _round_up(x, m):
    return ((x + m - 1) // m) * m


# ----------------------------------------------------------------------------
# Forward pass.
# ----------------------------------------------------------------------------
@jax.jit
def sac_forward(s, a, packed):
    """Pallas implementation of SAC.forward(s, a) -> (values_1, values_2)."""
    w1_s, w1_a, b12, w2, w3t, b3t = packed
    batch, state_size = s.shape
    action_size = a.shape[1]
    compute_dtype = w1_s.dtype

    s_c = s.astype(compute_dtype)
    a_c = a.astype(compute_dtype)

    # --- batch-tile selection ------------------------------------------------
    # Per-grid-step overhead dominates this 3-matmul MLP, so use the fattest
    # tile we can while still giving >= 2 "parallel" steps for training-size
    # batches (v7x megacore).  tb must be a multiple of 128 whenever the grid
    # has more than one step (lane-dense (2, tb) output block divisibility).
    if batch <= 128:
        tb = batch                     # single tile; block dims == full dims
        padded = batch
    else:
        tb = min(1024, _round_up(-(-batch // 2), 128))
        padded = _round_up(batch, tb)
        if padded != batch:
            # TODO(synk): ragged (non-power-of-two) training batches fall back
            # to a wrapper-side pad; common SAC batch sizes hit the pad-free path.
            s_c = jnp.pad(s_c, ((0, padded - batch), (0, 0)))
            a_c = jnp.pad(a_c, ((0, padded - batch), (0, 0)))

    grid = (padded // tb,)
    two_h = w2.shape[0]

    def const_spec(shape):
        # Constant index_map -> weights stay VMEM-resident across grid steps.
        return pl.BlockSpec(shape, lambda i: (0, 0))

    flops = 2 * batch * ((state_size + action_size) * two_h
                         + two_h * two_h + two_h * 2)
    bytes_accessed = int(
        s_c.size * s_c.dtype.itemsize + a_c.size * a_c.dtype.itemsize
        + 2 * padded * 4
        + sum(x.size * x.dtype.itemsize for x in (w1_s, w1_a, b12, w2, w3t, b3t)))

    out = pl.pallas_call(
        _sac_value_kernel,
        out_shape=jax.ShapeDtypeStruct((2, padded), jnp.float32),
        grid=grid,
        in_specs=[
            pl.BlockSpec((tb, state_size), lambda i: (i, 0)),    # s tile
            pl.BlockSpec((tb, action_size), lambda i: (i, 0)),   # a tile
            const_spec(w1_s.shape),
            const_spec(w1_a.shape),
            const_spec(b12.shape),
            const_spec(w2.shape),
            const_spec(w3t.shape),
            const_spec(b3t.shape),
        ],
        out_specs=pl.BlockSpec((2, tb), lambda i: (0, i)),       # lane-dense output
        compiler_params=pltpu.CompilerParams(
            dimension_semantics=("parallel",)),
        cost_estimate=pl.CostEstimate(
            flops=flops, transcendentals=0, bytes_accessed=bytes_accessed),
    )(s_c, a_c, w1_s, w1_a, b12, w2, w3t, b3t)

    return out[0, :batch][:, None], out[1, :batch][:, None]


# ----------------------------------------------------------------------------
# Pure-JAX reference (mirrors the PyTorch math; optional bf16 storage precision).
# ----------------------------------------------------------------------------
def _reference_forward(s, a, params1, params2, compute_dtype=jnp.float32):
    sa = jnp.concatenate([s, a], axis=1).astype(compute_dtype)

    def mlp(p):
        w1, b1, w2, b2, w3, b3 = p
        h = jnp.dot(sa, w1.astype(compute_dtype),
                    preferred_element_type=jnp.float32) + b1
        h = jnp.maximum(h, 0.0).astype(compute_dtype)
        h = jnp.dot(h, w2.astype(compute_dtype),
                    preferred_element_type=jnp.float32) + b2
        h = jnp.maximum(h, 0.0).astype(compute_dtype)
        return jnp.dot(h, w3.astype(compute_dtype),
                       preferred_element_type=jnp.float32) + b3

    return mlp(params1), mlp(params2)


if __name__ == "__main__":
    # Small shapes consistent with SAC._get_sa_value.
    batch = 8
    state_size = 16
    action_size = 8
    hidden = 32                       # params['network_size']
    in_dim = state_size + action_size

    key = jax.random.PRNGKey(0)
    k_s, k_a, k_p1, k_p2, k_s2, k_a2 = jax.random.split(key, 6)

    s = jax.random.normal(k_s, (batch, state_size), dtype=jnp.float32)
    a = jax.random.normal(k_a, (batch, action_size), dtype=jnp.float32)

    params1 = make_value_params(k_p1, in_dim, hidden)
    params2 = make_value_params(k_p2, in_dim, hidden)
    packed = pack_value_params(params1, params2, state_size)     # bf16 storage

    v1, v2 = sac_forward(s, a, packed)
    jax.block_until_ready((v1, v2))
    assert v1.shape == (batch, 1) and v2.shape == (batch, 1)

    # Tight check vs a reference using the same bf16 storage precision.
    r1, r2 = _reference_forward(s, a, params1, params2, jnp.bfloat16)
    assert jnp.allclose(v1, r1, atol=5e-3, rtol=5e-3)
    assert jnp.allclose(v2, r2, atol=5e-3, rtol=5e-3)

    # Loose check vs the exact f32 PyTorch math (bf16 storage error only).
    f1, f2 = _reference_forward(s, a, params1, params2, jnp.float32)
    assert jnp.allclose(v1, f1, atol=5e-2, rtol=5e-2)
    assert jnp.allclose(v2, f2, atol=5e-2, rtol=5e-2)

    # Also exercise the multi-tile path (grid >= 2, lane-dense (2, TB) blocks).
    batch_big = 256
    s_big = jax.random.normal(k_s2, (batch_big, state_size), dtype=jnp.float32)
    a_big = jax.random.normal(k_a2, (batch_big, action_size), dtype=jnp.float32)
    v1b, v2b = sac_forward(s_big, a_big, packed)
    jax.block_until_ready((v1b, v2b))
    assert v1b.shape == (batch_big, 1) and v2b.shape == (batch_big, 1)
    r1b, r2b = _reference_forward(s_big, a_big, params1, params2, jnp.bfloat16)
    assert jnp.allclose(v1b, r1b, atol=5e-3, rtol=5e-3)
    assert jnp.allclose(v2b, r2b, atol=5e-3, rtol=5e-3)

    print("KERNEL_OK")
</pallas_src>

<mosaic_0001>
module attributes {stable_mosaic.version = 11 : i64} {
  func.func @_sac_value_kernel(%arg0: i32, %arg1: memref<8x16xbf16, #tpu.memory_space<vmem>>, %arg2: memref<8x8xbf16, #tpu.memory_space<vmem>>, %arg3: memref<16x64xbf16, #tpu.memory_space<vmem>>, %arg4: memref<8x64xbf16, #tpu.memory_space<vmem>>, %arg5: memref<2x64xf32, #tpu.memory_space<vmem>>, %arg6: memref<64x64xbf16, #tpu.memory_space<vmem>>, %arg7: memref<2x64xbf16, #tpu.memory_space<vmem>>, %arg8: memref<2x1xf32, #tpu.memory_space<vmem>>, %arg9: memref<2x8xf32, #tpu.memory_space<vmem>>) attributes {dimension_semantics = [#tpu.dimension_semantics<parallel>], iteration_bounds = array<i64: 1>, scalar_prefetch = 0 : i64, scratch_operands = 0 : i64, tpu.core_type = #tpu.core_type<tc>, window_params = [{transform_indices = @transform_0, window_bounds = array<i64: 8, 16>}, {transform_indices = @transform_1, window_bounds = array<i64: 8, 8>}, {pipeline_mode = #tpu.pipeline_mode<synchronous>, transform_indices = @transform_2, window_bounds = array<i64: 16, 64>}, {pipeline_mode = #tpu.pipeline_mode<synchronous>, transform_indices = @transform_3, window_bounds = array<i64: 8, 64>}, {pipeline_mode = #tpu.pipeline_mode<synchronous>, transform_indices = @transform_4, window_bounds = array<i64: 2, 64>}, {pipeline_mode = #tpu.pipeline_mode<synchronous>, transform_indices = @transform_5, window_bounds = array<i64: 64, 64>}, {pipeline_mode = #tpu.pipeline_mode<synchronous>, transform_indices = @transform_6, window_bounds = array<i64: 2, 64>}, {pipeline_mode = #tpu.pipeline_mode<synchronous>, transform_indices = @transform_7, window_bounds = array<i64: 2, 1>}, {transform_indices = @transform_8, window_bounds = array<i64: 2, 8>}]} {
    %c0 = arith.constant 0 : index
    %c0_0 = arith.constant 0 : index
    %0 = vector.load %arg5[%c0, %c0_0] : memref<2x64xf32, #tpu.memory_space<vmem>>, vector<2x64xf32>
    %c0_1 = arith.constant 0 : index
    %c0_2 = arith.constant 0 : index
    %1 = vector.load %arg1[%c0_1, %c0_2] : memref<8x16xbf16, #tpu.memory_space<vmem>>, vector<8x16xbf16>
    %c0_3 = arith.constant 0 : index
    %c0_4 = arith.constant 0 : index
    %2 = vector.load %arg3[%c0_3, %c0_4] : memref<16x64xbf16, #tpu.memory_space<vmem>>, vector<16x64xbf16>
    %cst = arith.constant dense<0.000000e+00> : vector<8x64xf32>
    %3 = tpu.matmul %1, %2, %cst {dimension_numbers = #tpu.dot_dimension_numbers<[1], [0], [0], [1], [0, 0, 1, 1], [], []>} : vector<8x16xbf16>, vector<16x64xbf16>, vector<8x64xf32> -> vector<8x64xf32>
    %c0_5 = arith.constant 0 : index
    %c0_6 = arith.constant 0 : index
    %4 = vector.load %arg2[%c0_5, %c0_6] : memref<8x8xbf16, #tpu.memory_space<vmem>>, vector<8x8xbf16>
    %c0_7 = arith.constant 0 : index
    %c0_8 = arith.constant 0 : index
    %5 = vector.load %arg4[%c0_7, %c0_8] : memref<8x64xbf16, #tpu.memory_space<vmem>>, vector<8x64xbf16>
    %cst_9 = arith.constant dense<0.000000e+00> : vector<8x64xf32>
    %6 = tpu.matmul %4, %5, %cst_9 {dimension_numbers = #tpu.dot_dimension_numbers<[1], [0], [0], [1], [0, 0, 1, 1], [], []>} : vector<8x8xbf16>, vector<8x64xbf16>, vector<8x64xf32> -> vector<8x64xf32>
    %7 = arith.addf %3, %6 : vector<8x64xf32>
    %8 = vector.extract_strided_slice %0 {offsets = [0, 0], sizes = [1, 64], strides = [1, 1]} : vector<2x64xf32> to vector<1x64xf32>
    %9 = vector.broadcast %8 : vector<1x64xf32> to vector<8x64xf32>
    %10 = arith.addf %7, %9 : vector<8x64xf32>
    %cst_10 = arith.constant 0.000000e+00 : f32
    %11 = vector.broadcast %cst_10 : f32 to vector<8x64xf32>
    %12 = arith.maximumf %10, %11 : vector<8x64xf32>
    %13 = arith.truncf %12 : vector<8x64xf32> to vector<8x64xbf16>
    %c0_11 = arith.constant 0 : index
    %c0_12 = arith.constant 0 : index
    %14 = vector.load %arg6[%c0_11, %c0_12] : memref<64x64xbf16, #tpu.memory_space<vmem>>, vector<64x64xbf16>
    %cst_13 = arith.constant dense<0.000000e+00> : vector<8x64xf32>
    %15 = tpu.matmul %13, %14, %cst_13 {dimension_numbers = #tpu.dot_dimension_numbers<[1], [0], [0], [1], [0, 0, 1, 1], [], []>} : vector<8x64xbf16>, vector<64x64xbf16>, vector<8x64xf32> -> vector<8x64xf32>
    %16 = vector.extract_strided_slice %0 {offsets = [1, 0], sizes = [1, 64], strides = [1, 1]} : vector<2x64xf32> to vector<1x64xf32>
    %17 = vector.broadcast %16 : vector<1x64xf32> to vector<8x64xf32>
    %18 = arith.addf %15, %17 : vector<8x64xf32>
    %cst_14 = arith.constant 0.000000e+00 : f32
    %19 = vector.broadcast %cst_14 : f32 to vector<8x64xf32>
    %20 = arith.maximumf %18, %19 : vector<8x64xf32>
    %21 = arith.truncf %20 : vector<8x64xf32> to vector<8x64xbf16>
    %c0_15 = arith.constant 0 : index
    %c0_16 = arith.constant 0 : index
    %22 = vector.load %arg7[%c0_15, %c0_16] : memref<2x64xbf16, #tpu.memory_space<vmem>>, vector<2x64xbf16>
    %cst_17 = arith.constant dense<0.000000e+00> : vector<2x8xf32>
    %23 = tpu.matmul %22, %21, %cst_17 {dimension_numbers = #tpu.dot_dimension_numbers<[1], [1], [0], [0], [0, 0, 1, 0], [], []>} : vector<2x64xbf16>, vector<8x64xbf16>, vector<2x8xf32> -> vector<2x8xf32>
    %c0_18 = arith.constant 0 : index
    %c0_19 = arith.constant 0 : index
    %24 = vector.load %arg8[%c0_18, %c0_19] : memref<2x1xf32, #tpu.memory_space<vmem>>, vector<2x1xf32>
    %25 = vector.broadcast %24 : vector<2x1xf32> to vector<2x8xf32>
    %26 = arith.addf %23, %25 : vector<2x8xf32>
    %c0_20 = arith.constant 0 : index
    %c0_21 = arith.constant 0 : index
    %27 = vector.load %arg9[%c0_20, %c0_21] : memref<2x8xf32, #tpu.memory_space<vmem>>, vector<2x8xf32>
    tpu.vector_store %arg9[%c0_20, %c0_21], %26 {strides = array<i32>} : memref<2x8xf32, #tpu.memory_space<vmem>>, vector<2x8xf32>,
    return
  }
  func.func @transform_0(%arg0: i32) -> (i32, i32) {
    %c0_i32 = arith.constant 0 : i32
    %c0_i32_0 = arith.constant 0 : i32
    return %arg0, %c0_i32 : i32, i32
  }
  func.func @transform_1(%arg0: i32) -> (i32, i32) {
    %c0_i32 = arith.constant 0 : i32
    %c0_i32_0 = arith.constant 0 : i32
    return %arg0, %c0_i32 : i32, i32
  }
  func.func @transform_2(%arg0: i32) -> (i32, i32) {
    %c0_i32 = arith.constant 0 : i32
    %c0_i32_0 = arith.constant 0 : i32
    %c0_i32_1 = arith.constant 0 : i32
    return %c0_i32, %c0_i32_0 : i32, i32
  }
  func.func @transform_3(%arg0: i32) -> (i32, i32) {
    %c0_i32 = arith.constant 0 : i32
    %c0_i32_0 = arith.constant 0 : i32
    %c0_i32_1 = arith.constant 0 : i32
    return %c0_i32, %c0_i32_0 : i32, i32
  }
  func.func @transform_4(%arg0: i32) -> (i32, i32) {
    %c0_i32 = arith.constant 0 : i32
    %c0_i32_0 = arith.constant 0 : i32
    %c0_i32_1 = arith.constant 0 : i32
    return %c0_i32, %c0_i32_0 : i32, i32
  }
  func.func @transform_5(%arg0: i32) -> (i32, i32) {
    %c0_i32 = arith.constant 0 : i32
    %c0_i32_0 = arith.constant 0 : i32
    %c0_i32_1 = arith.constant 0 : i32
    return %c0_i32, %c0_i32_0 : i32, i32
  }
  func.func @transform_6(%arg0: i32) -> (i32, i32) {
    %c0_i32 = arith.constant 0 : i32
    %c0_i32_0 = arith.constant 0 : i32
    %c0_i32_1 = arith.constant 0 : i32
    return %c0_i32, %c0_i32_0 : i32, i32
  }
  func.func @transform_7(%arg0: i32) -> (i32, i32) {
    %c0_i32 = arith.constant 0 : i32
    %c0_i32_0 = arith.constant 0 : i32
    %c0_i32_1 = arith.constant 0 : i32
    return %c0_i32, %c0_i32_0 : i32, i32
  }
  func.func @transform_8(%arg0: i32) -> (i32, i32) {
    %c0_i32 = arith.constant 0 : i32
    %c0_i32_0 = arith.constant 0 : i32
    return %c0_i32, %arg0 : i32, i32
  }
}

</mosaic_0001>

<llo_original>
// kernel: sac_forward.1
$region0: #{sac_forward.1}
  #allocation0 [shape = 'u32[]', space=smem, size = 0x4, offset = 0x4, fixed_abs, tag = 'smem constant byte address 0x4 - core index']
  #allocation1 [shape = 'u32[144,128]{1,0:T(1,128)}', space=vmem, size = 0x12000, scoped, tag = 'internal scratch']
  %s0 = inlined_call_operand.vmem [shape: bf16[8,16], index: 0, kind: input, shape index: {}]
  %s1 = inlined_call_operand.vmem [shape: bf16[8,8], index: 1, kind: input, shape index: {}]
  %s2 = inlined_call_operand.hbm [shape: bf16[16,64], index: 2, kind: input, shape index: {}]
  %s3 = inlined_call_operand.vmem [shape: bf16[8,64], index: 3, kind: input, shape index: {}]
  %s4 = inlined_call_operand.hbm [shape: f32[2,64], index: 4, kind: input, shape index: {}]
  %s5 = inlined_call_operand.vmem [shape: bf16[64,64], index: 5, kind: input, shape index: {}]
  %s6 = inlined_call_operand.hbm [shape: bf16[2,64], index: 6, kind: input, shape index: {}]
  %s7 = inlined_call_operand.vmem [shape: f32[2,1], index: 7, kind: input, shape index: {}]
  %s8 = inlined_call_operand.vmem [shape: f32[2,8], index: 8, kind: output, shape index: {}]
  %s9 = sld [smem:[#allocation0]]
  $region54: #{sac_forward.1} parent=0
    _
  %s11 = ssub.s32 1, %s9
  %s12 = scalar_select 0, %s11, %s9
  $region1: #{sac_forward.1} parent=0
    #allocation2 [shape = 'u8[4096]{0}', space=vmem, size = 0x1000, scoped, tag = 'input window, operand 2, single buffered']
    #allocation3 [shape = 's32[1]{0}', space=sflag, size = 0x4, scoped, tag = 'scoped memory for sac_forward.1']
    #allocation4 [shape = 'u8[1024]{0}', space=vmem, size = 0x400, scoped, tag = 'input window, operand 4, single buffered']
    #allocation5 [shape = 's32[1]{0}', space=sflag, size = 0x4, scoped, tag = 'scoped memory for sac_forward.1']
    #allocation6 [shape = 'u8[512]{0}', space=vmem, size = 0x400, scoped, tag = 'input window, operand 6, single buffered']
    %13 = vsyncpa [#allocation3], 0
    %14 = vsyncpa [#allocation5], 0
    // Predicated region
    $region2: #{sac_forward.1} parent=1 // pred_check
      _
    $region3: #{sac_forward.1} parent=1 // pred_check_branch
      %16 = sbr.rel (0) target = $region5
    $region4: #{sac_forward.1} parent=1 // pred_region
      _
    $region5: #{sac_forward.1} parent=1 // pred_fallthru
      _
    // Predicated region
    $region6: #{sac_forward.1} parent=1 // pred_check
      _
    $region7: #{sac_forward.1} parent=1 // pred_check_branch
      %18 = sbr.rel (0) target = $region9
    $region8: #{sac_forward.1} parent=1 // pred_region
      _
    $region9: #{sac_forward.1} parent=1 // pred_fallthru
      _
    // Predicated region
    $region10: #{sac_forward.1} parent=1 // pred_check
      _
    $region11: #{sac_forward.1} parent=1 // pred_check_branch
      %20 = sbr.rel (0) target = $region13
    $region12: #{sac_forward.1} parent=1 // pred_region
      %s22 = ssub.s32 128, 128
      %23 = vsyncadd [#allocation3], %s22
      %s24 = sshll.u32 [#allocation2], 4
      %s25 = int_to_ptr.vmem [resolvable:$true] %s24
      %30 = dma.hbm_to_vmem [thread:$0]  %s2, 128, %s25, [#allocation3], 64, 64, 4
    $region13: #{sac_forward.1} parent=1 // pred_fallthru
      _
    // Predicated region
    $region14: #{sac_forward.1} parent=1 // pred_check
      _
    $region15: #{sac_forward.1} parent=1 // pred_check_branch
      %32 = sbr.rel (0) target = $region17
    $region16: #{sac_forward.1} parent=1 // pred_region
      _
    $region17: #{sac_forward.1} parent=1 // pred_fallthru
      _
    // Predicated region
    $region18: #{sac_forward.1} parent=1 // pred_check
      _
    $region19: #{sac_forward.1} parent=1 // pred_check_branch
      %34 = sbr.rel (0) target = $region21
    $region20: #{sac_forward.1} parent=1 // pred_region
      %s36 = ssub.s32 32, 32
      %37 = vsyncadd [#allocation5], %s36
      %s39 = sshll.u32 [#allocation4], 4
      %s40 = int_to_ptr.vmem [resolvable:$true] %s39
      %42 = dma.hbm_to_vmem [thread:$0]  %s4, 32, %s40, [#allocation5]
    $region21: #{sac_forward.1} parent=1 // pred_fallthru
      _
    // Predicated region
    $region22: #{sac_forward.1} parent=1 // pred_check
      _
    $region23: #{sac_forward.1} parent=1 // pred_check_branch
      %44 = sbr.rel (0) target = $region25
    $region24: #{sac_forward.1} parent=1 // pred_region
      _
    $region25: #{sac_forward.1} parent=1 // pred_fallthru
      _
    // Predicated region
    $region26: #{sac_forward.1} parent=1 // pred_check
      _
    $region27: #{sac_forward.1} parent=1 // pred_check_branch
      %46 = sbr.rel (0) target = $region29
    $region28: #{sac_forward.1} parent=1 // pred_region
      %s48 = ssub.s32 16, 16
      %49 = vsyncadd [#allocation5], %s48
      %s51 = sshll.u32 [#allocation6], 4
      %s52 = int_to_ptr.vmem [resolvable:$true] %s51
      %54 = dma.hbm_to_vmem [thread:$0]  %s6, 16, %s52, [#allocation5]
    $region29: #{sac_forward.1} parent=1 // pred_fallthru
      _
    // Predicated region
    $region30: #{sac_forward.1} parent=1 // pred_check
      _
    $region31: #{sac_forward.1} parent=1 // pred_check_branch
      %56 = sbr.rel (0) target = $region33
    $region32: #{sac_forward.1} parent=1 // pred_region
      _
    $region33: #{sac_forward.1} parent=1 // pred_fallthru
      _
    // Predicated region
    $region34: #{sac_forward.1} parent=1 // pred_check
      _
    $region35: #{sac_forward.1} parent=1 // pred_check_branch
      %58 = sbr.rel (0) target = $region37
    $region36: #{sac_forward.1} parent=1 // pred_region
      %59 = dma.done [#allocation3], 128
    $region37: #{sac_forward.1} parent=1 // pred_fallthru
      _
    // Predicated region
    $region38: #{sac_forward.1} parent=1 // pred_check
      _
    $region39: #{sac_forward.1} parent=1 // pred_check_branch
      %61 = sbr.rel (0) target = $region41
    $region40: #{sac_forward.1} parent=1 // pred_region
      %62 = dma.done [#allocation5], 32
    $region41: #{sac_forward.1} parent=1 // pred_fallthru
      _
    // Predicated region
    $region42: #{sac_forward.1} parent=1 // pred_check
      _
    $region43: #{sac_forward.1} parent=1 // pred_check_branch
      %64 = sbr.rel (0) target = $region45
    $region44: #{sac_forward.1} parent=1 // pred_region
      %65 = dma.done [#allocation5], 16
    $region45: #{sac_forward.1} parent=1 // pred_fallthru
      _
    %v67 = vld [vmem:[#allocation4] sm:$0x3]
    %v68 = vld [vmem:[%s0] sm:$0xf]
    %v69 = vld [vmem:[#allocation2] sm:$0xf]
    %v70 = vld [vmem:[#allocation2 + $0x4] sm:$0xf]
    %v71 = vld [vmem:[%s1] sm:$0xf]
    %v72 = vld [vmem:[%s3] sm:$0xf]
    %vm73 = vcmask 64512
    %v75 = vsel %vm73, %v71, 0
    %vm77 = vcmask 1043456
    %v79 = vsel %vm77, %v72, 0
    %81 = vmatprep.subr.bf16.mxu0 0
    %82 = vmatpush1.bf16.msra.mxu0 0
    %83 = vmatprep.subr.bf16.mxu0 0
    %84 = vmatpush1.bf16.msra.mxu0 0
    %85 = vmatprep.subr.bf16.mxu0 0
    %86 = vmatpush1.bf16.msra.mxu0 0
    %87 = vmatprep.subr.bf16.mxu0 0
    %88 = vmatpush1.bf16.msra.mxu0 0
    %89 = vmatprep.subr.bf16.mxu0 0
    %90 = vmatpush1.bf16.msra.mxu0 0
    %91 = vmatprep.subr.bf16.mxu0 0
    %92 = vmatpush1.bf16.msra.mxu0 0
    %93 = vmatprep.subr.bf16.mxu0 0
    %94 = vmatpush1.bf16.msra.mxu0 0
    %95 = vmatprep.subr.bf16.mxu0 0
    %96 = vmatpush1.bf16.msra.mxu0 %v79
    %97 = vmatprep.subr.bf16.mxu0 0
    %98 = vmatpush2.bf16.msra.mxu0 0
    %99 = vmatprep.subr.bf16.mxu0 0
    %100 = vmatpush2.bf16.msra.mxu0 0
    %101 = vmatprep.subr.bf16.mxu0 0
    %102 = vmatpush2.bf16.msra.mxu0 0
    %103 = vmatprep.subr.bf16.mxu0 0
    %104 = vmatpush2.bf16.msra.mxu0 0
    %105 = vmatprep.subr.bf16.mxu0 0
    %106 = vmatpush2.bf16.msra.mxu0 0
    %107 = vmatprep.subr.bf16.mxu0 0
    %108 = vmatpush2.bf16.msra.mxu0 0
    %109 = vmatprep.subr.bf16.mxu0 0
    %110 = vmatpush2.bf16.msra.mxu0 0
    %111 = vmatprep.subr.bf16.mxu0 0
    %112 = vmatpush2.bf16.msra.mxu0 0
    %113 = vmatprep.mubr.bf16.mxu0 0
    %114 = vmatmul.mubr.bf16.gmra.mxu0 %v75
    %v115 = vpop.f32.mrf.mxu0
    %v116 = vadd.f32 0.0, %v115
    %v117 = vpop.f32.mrf.mxu0
    %v118 = vpop.f32.mrf.mxu0
    %v119 = vpop.f32.mrf.mxu0
    %120 = vdwg.mxu0
    %v123 = vunpack.c.l.b16 %v69
    %v124 = vunpack.c.l.b16 %v70
    %v125 = vpack.c.b16 %v124, %v123
    %vm127 = vcmask 130048
    %v129 = vsel %vm127, %v68, 0
    %131 = vmatprep.subr.bf16.mxu0 0
    %132 = vmatpush1.bf16.msra.mxu0 0
    %133 = vmatprep.subr.bf16.mxu0 0
    %134 = vmatpush1.bf16.msra.mxu0 0
    %135 = vmatprep.subr.bf16.mxu0 0
    %136 = vmatpush1.bf16.msra.mxu0 0
    %137 = vmatprep.subr.bf16.mxu0 0
    %138 = vmatpush1.bf16.msra.mxu0 0
    %139 = vmatprep.subr.bf16.mxu0 0
    %140 = vmatpush1.bf16.msra.mxu0 0
    %141 = vmatprep.subr.bf16.mxu0 0
    %142 = vmatpush1.bf16.msra.mxu0 0
    %143 = vmatprep.subr.bf16.mxu0 0
    %144 = vmatpush1.bf16.msra.mxu0 0
    %145 = vmatprep.subr.bf16.mxu0 0
    %146 = vmatpush1.bf16.msra.mxu0 %v125
    %147 = vmatprep.subr.bf16.mxu0 0
    %148 = vmatpush2.bf16.msra.mxu0 0
    %149 = vmatprep.subr.bf16.mxu0 0
    %150 = vmatpush2.bf16.msra.mxu0 0
    %151 = vmatprep.subr.bf16.mxu0 0
    %152 = vmatpush2.bf16.msra.mxu0 0
    %153 = vmatprep.subr.bf16.mxu0 0
    %154 = vmatpush2.bf16.msra.mxu0 0
    %155 = vmatprep.subr.bf16.mxu0 0
    %156 = vmatpush2.bf16.msra.mxu0 0
    %157 = vmatprep.subr.bf16.mxu0 0
    %158 = vmatpush2.bf16.msra.mxu0 0
    %159 = vmatprep.subr.bf16.mxu0 0
    %160 = vmatpush2.bf16.msra.mxu0 0
    %161 = vmatprep.subr.bf16.mxu0 0
    %162 = vmatpush2.bf16.msra.mxu0 0
    %163 = vmatprep.mubr.bf16.mxu0 0
    %164 = vmatmul.mubr.bf16.gmra.mxu0 %v129
    %v165 = vpop.f32.mrf.mxu0
    %v166 = vadd.f32 %v116, %v165
    %v167 = vpop.f32.mrf.mxu0
    %v168 = vpop.f32.mrf.mxu0
    %v169 = vpop.f32.mrf.mxu0
    %170 = vdwg.mxu0
    %v171 = vlaneseq
    %v172 = vshrl.u32 %v171, 7
    %v173 = vsub.s32 0, %v172
    %v174 = vrot.slane %v67, %v173
    %v175 = vadd.f32 %v166, %v174
    %v176 = vmax.f32 %v175, 0.0
    %v177 = vpack.c.bf16 %v176, %v176
    %v178 = vld [vmem:[%s5] sm:$0xf]
    %v179 = vld [vmem:[%s5 + $0x4] sm:$0xf]
    %v180 = vld [vmem:[%s5 + $0x8] sm:$0xf]
    %v181 = vld [vmem:[%s5 + $0xc] sm:$0xf]
    %v182 = vld [vmem:[%s5 + $0x10] sm:$0xf]
    %v183 = vld [vmem:[%s5 + $0x14] sm:$0xf]
    %v184 = vld [vmem:[%s5 + $0x18] sm:$0xf]
    %v185 = vld [vmem:[%s5 + $0x1c] sm:$0xf]
    %v186 = vlaneseq
    %v187 = vshrl.u32 %v186, 7
    %v188 = vsub.s32 1, %v187
    %v189 = vrot.slane %v67, %v188
    %v198 = vunpack.c.l.b16 %v178
    %v199 = vunpack.c.l.b16 %v179
    %v200 = vunpack.c.l.b16 %v180
    %v201 = vunpack.c.l.b16 %v181
    %v202 = vunpack.c.l.b16 %v182
    %v203 = vunpack.c.l.b16 %v183
    %v204 = vunpack.c.l.b16 %v184
    %v205 = vunpack.c.l.b16 %v185
    %v206 = vpack.c.b16 %v199, %v198
    %v207 = vpack.c.b16 %v201, %v200
    %v208 = vpack.c.b16 %v203, %v202
    %v209 = vpack.c.b16 %v205, %v204
    %vm214 = vcmask 523264
    %v216 = vsel %vm214, %v177, 0
    %218 = vmatprep.subr.bf16.mxu0 0
    %219 = vmatpush1.bf16.msra.mxu0 0
    %220 = vmatprep.subr.bf16.mxu0 0
    %221 = vmatpush1.bf16.msra.mxu0 0
    %222 = vmatprep.subr.bf16.mxu0 0
    %223 = vmatpush1.bf16.msra.mxu0 0
    %224 = vmatprep.subr.bf16.mxu0 0
    %225 = vmatpush1.bf16.msra.mxu0 0
    %226 = vmatprep.subr.bf16.mxu0 0
    %227 = vmatpush1.bf16.msra.mxu0 %v209
    %228 = vmatprep.subr.bf16.mxu0 0
    %229 = vmatpush1.bf16.msra.mxu0 %v208
    %230 = vmatprep.subr.bf16.mxu0 0
    %231 = vmatpush1.bf16.msra.mxu0 %v207
    %232 = vmatprep.subr.bf16.mxu0 0
    %233 = vmatpush1.bf16.msra.mxu0 %v206
    %234 = vmatprep.subr.bf16.mxu0 0
    %235 = vmatpush2.bf16.msra.mxu0 0
    %236 = vmatprep.subr.bf16.mxu0 0
    %237 = vmatpush2.bf16.msra.mxu0 0
    %238 = vmatprep.subr.bf16.mxu0 0
    %239 = vmatpush2.bf16.msra.mxu0 0
    %240 = vmatprep.subr.bf16.mxu0 0
    %241 = vmatpush2.bf16.msra.mxu0 0
    %242 = vmatprep.subr.bf16.mxu0 0
    %243 = vmatpush2.bf16.msra.mxu0 0
    %244 = vmatprep.subr.bf16.mxu0 0
    %245 = vmatpush2.bf16.msra.mxu0 0
    %246 = vmatprep.subr.bf16.mxu0 0
    %247 = vmatpush2.bf16.msra.mxu0 0
    %248 = vmatprep.subr.bf16.mxu0 0
    %249 = vmatpush2.bf16.msra.mxu0 0
    %250 = vmatprep.mubr.bf16.mxu0 0
    %251 = vmatmul.mubr.bf16.gmra.mxu0 %v216
    %v252 = vpop.f32.mrf.mxu0
    %v253 = vadd.f32 %v189, %v252
    %v254 = vpop.f32.mrf.mxu0
    %v255 = vpop.f32.mrf.mxu0
    %v256 = vpop.f32.mrf.mxu0
    %257 = vdwg.mxu0
    %v258 = vmax.f32 %v253, 0.0
    %v259 = vpack.c.bf16 %v258, %v258
    %v260 = vld [vmem:[#allocation6] sm:$0x1]
    %v261 = vld [vmem:[%s7] sm:$0x3]
    %263 = vset.pattern.permute.xlu0 0
    %264 = vperm.xlu0 %263, %v261
    %v265 = vpop.permute.xlu0 %264
    %v268 = vsel %vm214, %v260, 0
    %v271 = vsel %vm214, %v259, 0
    %273 = vmatprep.subr.bf16.mxu0 0
    %274 = vmatpush1.bf16.xpose.msra.mxu0 0
    %275 = vmatprep.subr.bf16.mxu0 0
    %276 = vmatpush1.bf16.xpose.msra.mxu0 0
    %277 = vmatprep.subr.bf16.mxu0 0
    %278 = vmatpush1.bf16.xpose.msra.mxu0 0
    %279 = vmatprep.subr.bf16.mxu0 0
    %280 = vmatpush1.bf16.xpose.msra.mxu0 0
    %281 = vmatprep.subr.bf16.mxu0 0
    %282 = vmatpush1.bf16.xpose.msra.mxu0 0
    %283 = vmatprep.subr.bf16.mxu0 0
    %284 = vmatpush1.bf16.xpose.msra.mxu0 0
    %285 = vmatprep.subr.bf16.mxu0 0
    %286 = vmatpush1.bf16.xpose.msra.mxu0 0
    %287 = vmatprep.subr.bf16.mxu0 0
    %288 = vmatpush1.bf16.xpose.msra.mxu0 %v271
    %289 = vmatprep.subr.bf16.mxu0 0
    %290 = vmatpush2.bf16.xpose.msra.mxu0 0
    %291 = vmatprep.subr.bf16.mxu0 0
    %292 = vmatpush2.bf16.xpose.msra.mxu0 0
    %293 = vmatprep.subr.bf16.mxu0 0
    %294 = vmatpush2.bf16.xpose.msra.mxu0 0
    %295 = vmatprep.subr.bf16.mxu0 0
    %296 = vmatpush2.bf16.xpose.msra.mxu0 0
    %297 = vmatprep.subr.bf16.mxu0 0
    %298 = vmatpush2.bf16.xpose.msra.mxu0 0
    %299 = vmatprep.subr.bf16.mxu0 0
    %300 = vmatpush2.bf16.xpose.msra.mxu0 0
    %301 = vmatprep.subr.bf16.mxu0 0
    %302 = vmatpush2.bf16.xpose.msra.mxu0 0
    %303 = vmatprep.subr.bf16.mxu0 0
    %304 = vmatpush2.bf16.xpose.msra.mxu0 0
    %305 = vmatprep.mubr.bf16.mxu0 0
    %306 = vmatmul.mubr.bf16.gmra.mxu0 %v268
    %v307 = vpop.f32.mrf.mxu0
    %v308 = vadd.f32 %v265, %v307
    %v309 = vpop.f32.mrf.mxu0
    %v310 = vpop.f32.mrf.mxu0
    %v311 = vpop.f32.mrf.mxu0
    %312 = vdwg.mxu0
    %vm313 = vcmask 58368
    %314 = vst.msk [vmem:[%s8] sm:$0x3] %vm313, %v308
    // Predicated region
    $region46: #{sac_forward.1} parent=1 // pred_check
      _
    $region47: #{sac_forward.1} parent=1 // pred_check_branch
      %316 = sbr.rel (0) target = $region49
    $region48: #{sac_forward.1} parent=1 // pred_region
      _
    $region49: #{sac_forward.1} parent=1 // pred_fallthru
      _
    // Predicated region
    $region50: #{sac_forward.1} parent=1 // pred_check
      _
    $region51: #{sac_forward.1} parent=1 // pred_check_branch
      %318 = sbr.rel (0) target = $region53
    $region52: #{sac_forward.1} parent=1 // pred_region
      _
    $region53: #{sac_forward.1} parent=1 // pred_fallthru
      _
    %319 = vsyncpa [#allocation3], 1
    %320 = vsyncpa [#allocation5], 1

</llo_original>
